<compile_context>
chip_gen: v5e
topology: v5e:2x2
jax: 0.10.0
libtpu: 0.0.40
codegen_flags: <defaults>
</compile_context>

<pallas_src>
import math

import jax
import jax.numpy as jnp
from jax import lax
from jax.experimental import pallas as pl
from jax.experimental.pallas import tpu as pltpu


# --------------------------------------------------------------------------- #
# Kernel
# --------------------------------------------------------------------------- #
def _make_attn_kernel(T, n_t):
    """Kernel factory; T (true sequence length) and n_t (T grid steps) are static."""

    def kernel(hid_ref, enc_ref, w1_ref, w2_ref, b_ref, v_ref,   # inputs
               ctx_ref, attn_ref,                                # outputs
               eh_sc, m_sc, l_sc, acc_sc, s_sc):                 # scratch
        # Per grid step (bi, ti):
        #   hid_ref : (1, Bb, H)      enc_ref : (Tb, Bb, H)   (native dtype, e.g. bf16)
        #   w1/w2   : (H, H)          b/v     : (1, H) f32
        #   ctx_ref : (1, Bb, H)      attn_ref: (Bb, T)       (resident across ti)
        #   eh_sc   : (Bb, H) f32     m/l     : (Bb, 1) f32
        #   acc_sc  : (Bb, H) f32     s_sc    : (n_t, Bb, Tb) f32 raw-score stash
        ti = pl.program_id(1)
        tblk, bblk, H = enc_ref.shape
        ragged_t = (n_t * tblk) != T

        @pl.when(ti == 0)
        def _():
            # Hidden projection + bias: hoisted out of the T loop (once per batch block).
            eh_sc[...] = jnp.dot(hid_ref[0], w1_ref[...],
                                 preferred_element_type=jnp.float32) + b_ref[...]
            m_sc[...] = jnp.full_like(m_sc, -jnp.inf)
            l_sc[...] = jnp.zeros_like(l_sc)
            acc_sc[...] = jnp.zeros_like(acc_sc)

        enc = enc_ref[...]                                        # (Tb, Bb, H)

        # Encoder projection: fold (Tb, Bb) onto the MXU row dimension.  When Bb is a
        # multiple of 8 this reshape is a pure view; for tiny B it is a small relayout.
        # TODO(synk): switch to a 3-D dot_general once Mosaic folds leading free dims
        # without a copy.
        e_e = jnp.dot(enc.reshape(tblk * bblk, H), w2_ref[...],
                      preferred_element_type=jnp.float32).reshape(tblk, bblk, H)
        energy = jnp.tanh(e_e + eh_sc[...][None, :, :])           # (Tb, Bb, H) f32
        scores_tb = jnp.sum(energy * v_ref[...], axis=-1)         # (Tb, Bb)  lane reduce

        if ragged_t:
            # Trailing T block reads past the array: mask padded rows.  (Partial
            # *batch* blocks need no masking: every reduction is per batch row and
            # Pallas masks those rows on the HBM store.)
            t_idx = ti * tblk + lax.broadcasted_iota(jnp.int32, (tblk, bblk), 0)
            valid = t_idx < T
            scores_tb = jnp.where(valid, scores_tb, -jnp.inf)
            enc_ctx = jnp.where(valid[:, :, None], enc.astype(jnp.float32), 0.0)
        else:
            enc_ctx = enc

        # Lane-dense online softmax: work in (Bb, Tb) so max/exp/sum reduce over lanes.
        scores = jnp.transpose(scores_tb, (1, 0))                 # (Bb, Tb) f32
        s_sc[ti] = scores                                         # stash raw scores

        m_prev = m_sc[...]
        m_new = jnp.maximum(m_prev, jnp.max(scores, axis=-1, keepdims=True))
        alpha = jnp.exp(m_prev - m_new)                           # (Bb, 1)
        p = jnp.exp(scores - m_new)                               # (Bb, Tb)
        l_sc[...] = alpha * l_sc[...] + jnp.sum(p, axis=-1, keepdims=True)
        p_tb = jnp.transpose(p, (1, 0))                           # (Tb, Bb)  small XLU op
        acc_sc[...] = alpha * acc_sc[...] + jnp.sum(p_tb[:, :, None] * enc_ctx, axis=0)
        m_sc[...] = m_new

        @pl.when(ti == n_t - 1)
        def _():
            inv_l = pl.reciprocal(l_sc[...], approx=False)        # exact: probs sum to 1
            ctx_ref[0] = (acc_sc[...] * inv_l).astype(ctx_ref.dtype)
            m_fin = m_sc[...]
            for tb in range(n_t):                                 # static unroll, n_t small
                lo = tb * tblk
                hi = min(lo + tblk, T)
                p_blk = jnp.exp(s_sc[tb] - m_fin) * inv_l         # (Bb, Tb)
                attn_ref[:, lo:hi] = p_blk[:, :hi - lo].astype(attn_ref.dtype)

    return kernel


# --------------------------------------------------------------------------- #
# Block picking / VMEM accounting
# --------------------------------------------------------------------------- #
def _vmem_capacity_bytes():
    try:
        return int(pltpu.get_tpu_info().vmem_capacity_bytes)
    except Exception:
        return 64 * 1024 * 1024        # conservative default (v7x per-core VMEM)


def _round_up(x, m):
    return -(-x // m) * m


def _pick_blocks(B, T, H, enc_itemsize, budget_bytes):
    """Pick (batch_block, t_block) so the per-step VMEM footprint fits the budget.

    The footprint counts: double-buffered encoder input tile, ~4 (Tb,Bb,H) f32
    in-kernel temporaries (e_e / energy / masked enc / probs*enc product), the
    resident score stash + attention output block + small accumulators, and the
    (double-buffered) weights.
    """
    def footprint(bblk, tblk):
        n_t = pl.cdiv(T, tblk)
        tile = tblk * bblk * H * (2 * enc_itemsize + 4 * 4)
        stash = n_t * _round_up(bblk, 8) * _round_up(tblk, 128) * 4
        resident = stash + bblk * (T + 4 * H + 16) * 4
        weights = 4 * H * H * enc_itemsize + 8 * H * 4
        return tile + resident + weights

    # Legal batch blocks: the full B, or a multiple of 8 ((8,128) rule on the
    # second-minor dim).  Prefer >=2 batch steps when an 8-aligned split exists,
    # so the 'parallel' batch axis can span both v7x TensorCores.
    aligned = list(range(8 * (B // 8), 0, -8))
    two_step = [bb for bb in aligned if bb <= pl.cdiv(B, 2)]
    b_cands = (two_step + [B] + aligned) if two_step else ([B] + aligned)

    t_cands = [T] + [t for t in (4096, 2048, 1024, 512, 256, 128, 64, 32, 16, 8)
                     if t < T]

    def choose_t(bblk, n_b):
        fitting = [t for t in t_cands if footprint(bblk, t) <= budget_bytes]
        if not fitting:
            return None
        best = fitting[0]
        # Avoid a degenerate single-step grid (no DMA/compute overlap): take a
        # smaller T tile (>= 256 rows) if that yields a few pipeline steps.
        if n_b * pl.cdiv(T, best) < 4:
            for t in fitting:
                if t >= 256 and n_b * pl.cdiv(T, t) >= 4:
                    return t
        return best

    for bblk in b_cands:
        t = choose_t(bblk, pl.cdiv(B, bblk))
        if t is not None:
            return bblk, t
    return b_cands[-1], t_cands[-1]


# --------------------------------------------------------------------------- #
# Wrapper
# --------------------------------------------------------------------------- #
def attn_forward(hidden, encoder_outputs, W, b, v, *, blocks=None):
    """hidden: (1, B, H), encoder_outputs: (T, B, H).  Returns ((1, B, H), (B, T))."""
    H = W.shape[0]
    T, B, _ = encoder_outputs.shape

    # Keep the big (T, B, H) tensor in its native dtype (no wrapper-side cast / HBM
    # rewrite).  Small weights are cast to match so the MXU dots run natively (bf16
    # inputs -> bf16 matmul) with f32 accumulation.
    in_dtype = encoder_outputs.dtype
    hidden = hidden.astype(in_dtype)
    w1 = W[:, :H].T.astype(in_dtype)           # (H, H), acts on hidden
    w2 = W[:, H:].T.astype(in_dtype)           # (H, H), acts on encoder outputs
    b2d = b.reshape(1, H).astype(jnp.float32)
    v2d = v.reshape(1, H).astype(jnp.float32)
    # TODO(synk): zero-pad H (W columns / bias / v) to a multiple of 128 for
    # lane-dense energy tiles when the production hidden size is not 128-aligned.

    vmem_phys = _vmem_capacity_bytes()
    if blocks is None:
        bblk, tblk = _pick_blocks(B, T, H, jnp.dtype(in_dtype).itemsize,
                                  vmem_phys // 3)
    else:
        bblk, tblk = blocks
    assert bblk == B or bblk % 8 == 0, "batch block must be B or a multiple of 8"
    n_b = pl.cdiv(B, bblk)
    n_t = pl.cdiv(T, tblk)

    kernel = _make_attn_kernel(T, n_t)

    ctx, attn = pl.pallas_call(
        kernel,
        out_shape=(jax.ShapeDtypeStruct((1, B, H), in_dtype),
                   jax.ShapeDtypeStruct((B, T), in_dtype)),
        grid=(n_b, n_t),
        in_specs=[
            pl.BlockSpec((1, bblk, H), lambda bi, ti: (0, bi, 0)),      # hidden
            pl.BlockSpec((tblk, bblk, H), lambda bi, ti: (ti, bi, 0)),  # encoder outputs
            pl.BlockSpec((H, H), lambda bi, ti: (0, 0)),                # W1 (hidden)
            pl.BlockSpec((H, H), lambda bi, ti: (0, 0)),                # W2 (encoder)
            pl.BlockSpec((1, H), lambda bi, ti: (0, 0)),                # bias
            pl.BlockSpec((1, H), lambda bi, ti: (0, 0)),                # v
        ],
        out_specs=(pl.BlockSpec((1, bblk, H), lambda bi, ti: (0, bi, 0)),  # context
                   pl.BlockSpec((bblk, T), lambda bi, ti: (bi, 0))),       # attn probs
        scratch_shapes=[
            pltpu.VMEM((bblk, H), jnp.float32),          # e_h (hidden projection)
            pltpu.VMEM((bblk, 1), jnp.float32),          # m   (running max)
            pltpu.VMEM((bblk, 1), jnp.float32),          # l   (running denominator)
            pltpu.VMEM((bblk, H), jnp.float32),          # acc (context accumulator)
            pltpu.VMEM((n_t, bblk, tblk), jnp.float32),  # raw-score stash
        ],
        compiler_params=pltpu.CompilerParams(
            dimension_semantics=("parallel", "arbitrary"),
            vmem_limit_bytes=int(vmem_phys * 3 // 4),
        ),
    )(hidden, encoder_outputs, w1, w2, b2d, v2d)
    return ctx, attn


# --------------------------------------------------------------------------- #
# Pure-JAX reference (mirrors the PyTorch module line-by-line)
# --------------------------------------------------------------------------- #
def attn_reference(hidden, encoder_outputs, W, b, v):
    enc = jnp.transpose(encoder_outputs, (1, 0, 2))               # (B, T, H)
    B, T, H = enc.shape
    Hrep = jnp.broadcast_to(jnp.transpose(hidden, (1, 0, 2)), (B, T, H))
    cat = jnp.concatenate([Hrep, enc], axis=2)                    # (B, T, 2H)
    energy = jnp.tanh(jnp.einsum("btk,hk->bth", cat, W) + b)      # (B, T, H)
    scores = jnp.einsum("h,bth->bt", v, energy)[:, None, :]       # (B, 1, T)
    probs = jax.nn.softmax(scores, axis=2)
    context = jnp.einsum("bqt,bth->bqh", probs, enc)              # (B, 1, H)
    return jnp.transpose(context, (1, 0, 2)), probs[:, 0, :]


def _make_params(key, H):
    k_w, k_b, k_v = jax.random.split(key, 3)
    stdv = 1.0 / math.sqrt(2 * H)
    W = jax.random.uniform(k_w, (H, 2 * H), jnp.float32, -stdv, stdv)
    b = jax.random.uniform(k_b, (H,), jnp.float32, -stdv, stdv)
    v = jax.random.normal(k_v, (H,), jnp.float32) * (1.0 / math.sqrt(H))
    return W, b, v


if __name__ == "__main__":
    key = jax.random.PRNGKey(0)
    k0, k1, k2, kp = jax.random.split(key, 4)

    # --- Case 1: small single-block f32 (module-sized example) ----------------
    B, T, H = 2, 8, 32
    W, b, v = _make_params(kp, H)
    hidden = jax.random.normal(jax.random.fold_in(k0, 0), (1, B, H), jnp.float32)
    enc = jax.random.normal(jax.random.fold_in(k0, 1), (T, B, H), jnp.float32)
    ctx, attn = attn_forward(hidden, enc, W, b, v)
    jax.block_until_ready((ctx, attn))
    ctx_r, attn_r = attn_reference(hidden, enc, W, b, v)
    assert ctx.shape == (1, B, H) and attn.shape == (B, T)
    assert jnp.allclose(ctx, ctx_r, atol=2e-3, rtol=2e-3)
    assert jnp.allclose(attn, attn_r, atol=2e-3, rtol=2e-3)

    # --- Case 2: multi batch-block + T-blocked online-softmax (ragged T) ------
    B, T, H = 16, 40, 32
    hidden = jax.random.normal(jax.random.fold_in(k1, 0), (1, B, H), jnp.float32)
    enc = jax.random.normal(jax.random.fold_in(k1, 1), (T, B, H), jnp.float32)
    ctx, attn = attn_forward(hidden, enc, W, b, v, blocks=(8, 16))
    jax.block_until_ready((ctx, attn))
    ctx_r, attn_r = attn_reference(hidden, enc, W, b, v)
    assert jnp.allclose(ctx, ctx_r, atol=2e-3, rtol=2e-3)
    assert jnp.allclose(attn, attn_r, atol=2e-3, rtol=2e-3)

    # --- Case 3: bf16 pass-through (no wrapper f32 cast of the big tensors) ---
    B, T, H = 4, 24, 32
    hidden = jax.random.normal(jax.random.fold_in(k2, 0), (1, B, H), jnp.float32)
    enc = jax.random.normal(jax.random.fold_in(k2, 1), (T, B, H), jnp.float32)
    ctx, attn = attn_forward(hidden.astype(jnp.bfloat16),
                             enc.astype(jnp.bfloat16), W, b, v)
    jax.block_until_ready((ctx, attn))
    ctx_r, attn_r = attn_reference(hidden, enc, W, b, v)     # f32 truth
    assert ctx.dtype == jnp.bfloat16 and attn.dtype == jnp.bfloat16
    assert jnp.allclose(ctx.astype(jnp.float32), ctx_r, atol=5e-2, rtol=5e-2)
    assert jnp.allclose(attn.astype(jnp.float32), attn_r, atol=5e-2, rtol=5e-2)

    print("KERNEL_OK")
</pallas_src>

<mosaic_0001>
module attributes {stable_mosaic.version = 11 : i64} {
  func.func @kernel(%arg0: i32, %arg1: i32, %arg2: memref<1x2x32xf32, #tpu.memory_space<vmem>>, %arg3: memref<8x2x32xf32, #tpu.memory_space<vmem>>, %arg4: memref<32x32xf32, #tpu.memory_space<vmem>>, %arg5: memref<32x32xf32, #tpu.memory_space<vmem>>, %arg6: memref<1x32xf32, #tpu.memory_space<vmem>>, %arg7: memref<1x32xf32, #tpu.memory_space<vmem>>, %arg8: memref<1x2x32xf32, #tpu.memory_space<vmem>>, %arg9: memref<2x8xf32, #tpu.memory_space<vmem>>, %arg10: memref<2x32xf32, #tpu.memory_space<vmem>>, %arg11: memref<2x1xf32, #tpu.memory_space<vmem>>, %arg12: memref<2x1xf32, #tpu.memory_space<vmem>>, %arg13: memref<2x32xf32, #tpu.memory_space<vmem>>, %arg14: memref<1x2x8xf32, #tpu.memory_space<vmem>>) attributes {dimension_semantics = [#tpu.dimension_semantics<parallel>, #tpu.dimension_semantics<arbitrary>], iteration_bounds = array<i64: 1, 1>, scalar_prefetch = 0 : i64, scratch_operands = 5 : i64, tpu.core_type = #tpu.core_type<tc>, window_params = [{transform_indices = @transform_0, window_bounds = array<i64: 1, 2, 32>}, {transform_indices = @transform_1, window_bounds = array<i64: 8, 2, 32>}, {pipeline_mode = #tpu.pipeline_mode<synchronous>, transform_indices = @transform_2, window_bounds = array<i64: 32, 32>}, {pipeline_mode = #tpu.pipeline_mode<synchronous>, transform_indices = @transform_3, window_bounds = array<i64: 32, 32>}, {pipeline_mode = #tpu.pipeline_mode<synchronous>, transform_indices = @transform_4, window_bounds = array<i64: 1, 32>}, {pipeline_mode = #tpu.pipeline_mode<synchronous>, transform_indices = @transform_5, window_bounds = array<i64: 1, 32>}, {transform_indices = @transform_6, window_bounds = array<i64: 1, 2, 32>}, {transform_indices = @transform_7, window_bounds = array<i64: 2, 8>}]} {
    %c0_i32 = arith.constant 0 : i32
    %0 = arith.cmpi eq, %arg1, %c0_i32 : i32
    %1 = arith.extui %0 : i1 to i32
    %c0_i32_0 = arith.constant 0 : i32
    %2 = arith.cmpi ne, %1, %c0_i32_0 : i32
    scf.if %2 {
      %c0_29 = arith.constant 0 : index
      %c0_30 = arith.constant 0 : index
      %c0_31 = arith.constant 0 : index
      %52 = vector.load %arg2[%c0_29, %c0_30, %c0_31] : memref<1x2x32xf32, #tpu.memory_space<vmem>>, vector<1x2x32xf32>
      %53 = vector.shape_cast %52 : vector<1x2x32xf32> to vector<2x32xf32>
      %c0_32 = arith.constant 0 : index
      %c0_33 = arith.constant 0 : index
      %54 = vector.load %arg4[%c0_32, %c0_33] : memref<32x32xf32, #tpu.memory_space<vmem>>, vector<32x32xf32>
      %cst_34 = arith.constant dense<0.000000e+00> : vector<2x32xf32>
      %55 = tpu.matmul %53, %54, %cst_34 {dimension_numbers = #tpu.dot_dimension_numbers<[1], [0], [0], [1], [0, 0, 1, 1], [], []>} : vector<2x32xf32>, vector<32x32xf32>, vector<2x32xf32> -> vector<2x32xf32>
      %c0_35 = arith.constant 0 : index
      %c0_36 = arith.constant 0 : index
      %56 = vector.load %arg6[%c0_35, %c0_36] : memref<1x32xf32, #tpu.memory_space<vmem>>, vector<1x32xf32>
      %57 = vector.broadcast %56 : vector<1x32xf32> to vector<2x32xf32>
      %58 = arith.addf %55, %57 : vector<2x32xf32>
      %c0_37 = arith.constant 0 : index
      %c0_38 = arith.constant 0 : index
      %59 = vector.load %arg10[%c0_37, %c0_38] : memref<2x32xf32, #tpu.memory_space<vmem>>, vector<2x32xf32>
      tpu.vector_store %arg10[%c0_37, %c0_38], %58 {strides = array<i32>} : memref<2x32xf32, #tpu.memory_space<vmem>>, vector<2x32xf32>,
      %cst_39 = arith.constant 0xFF800000 : f32
      %60 = vector.broadcast %cst_39 : f32 to vector<2x1xf32>
      %c0_40 = arith.constant 0 : index
      %c0_41 = arith.constant 0 : index
      %61 = vector.load %arg11[%c0_40, %c0_41] : memref<2x1xf32, #tpu.memory_space<vmem>>, vector<2x1xf32>
      tpu.vector_store %arg11[%c0_40, %c0_41], %60 {strides = array<i32>} : memref<2x1xf32, #tpu.memory_space<vmem>>, vector<2x1xf32>,
      %cst_42 = arith.constant 0.000000e+00 : f32
      %62 = vector.broadcast %cst_42 : f32 to vector<2x1xf32>
      %c0_43 = arith.constant 0 : index
      %c0_44 = arith.constant 0 : index
      %63 = vector.load %arg12[%c0_43, %c0_44] : memref<2x1xf32, #tpu.memory_space<vmem>>, vector<2x1xf32>
      tpu.vector_store %arg12[%c0_43, %c0_44], %62 {strides = array<i32>} : memref<2x1xf32, #tpu.memory_space<vmem>>, vector<2x1xf32>,
      %cst_45 = arith.constant 0.000000e+00 : f32
      %64 = vector.broadcast %cst_45 : f32 to vector<2x32xf32>
      %c0_46 = arith.constant 0 : index
      %c0_47 = arith.constant 0 : index
      %65 = vector.load %arg13[%c0_46, %c0_47] : memref<2x32xf32, #tpu.memory_space<vmem>>, vector<2x32xf32>
      tpu.vector_store %arg13[%c0_46, %c0_47], %64 {strides = array<i32>} : memref<2x32xf32, #tpu.memory_space<vmem>>, vector<2x32xf32>,
    } else {
    }
    %c0 = arith.constant 0 : index
    %c0_1 = arith.constant 0 : index
    %c0_2 = arith.constant 0 : index
    %3 = vector.load %arg3[%c0, %c0_1, %c0_2] : memref<8x2x32xf32, #tpu.memory_space<vmem>>, vector<8x2x32xf32>
    %4 = vector.shape_cast %3 : vector<8x2x32xf32> to vector<16x32xf32>
    %c0_3 = arith.constant 0 : index
    %c0_4 = arith.constant 0 : index
    %5 = vector.load %arg5[%c0_3, %c0_4] : memref<32x32xf32, #tpu.memory_space<vmem>>, vector<32x32xf32>
    %cst = arith.constant dense<0.000000e+00> : vector<16x32xf32>
    %6 = tpu.matmul %4, %5, %cst {dimension_numbers = #tpu.dot_dimension_numbers<[1], [0], [0], [1], [0, 0, 1, 1], [], []>} : vector<16x32xf32>, vector<32x32xf32>, vector<16x32xf32> -> vector<16x32xf32>
    %7 = vector.shape_cast %6 : vector<16x32xf32> to vector<8x2x32xf32>
    %c0_5 = arith.constant 0 : index
    %c0_6 = arith.constant 0 : index
    %8 = vector.load %arg10[%c0_5, %c0_6] : memref<2x32xf32, #tpu.memory_space<vmem>>, vector<2x32xf32>
    %9 = vector.shape_cast %8 : vector<2x32xf32> to vector<1x2x32xf32>
    %10 = vector.broadcast %9 : vector<1x2x32xf32> to vector<8x2x32xf32>
    %11 = arith.addf %7, %10 : vector<8x2x32xf32>
    %12 = math.tanh %11 : vector<8x2x32xf32>
    %c0_7 = arith.constant 0 : index
    %c0_8 = arith.constant 0 : index
    %13 = vector.load %arg7[%c0_7, %c0_8] : memref<1x32xf32, #tpu.memory_space<vmem>>, vector<1x32xf32>
    %14 = vector.shape_cast %13 : vector<1x32xf32> to vector<1x1x32xf32>
    %15 = vector.broadcast %14 : vector<1x1x32xf32> to vector<8x2x32xf32>
    %16 = arith.mulf %12, %15 : vector<8x2x32xf32>
    %cst_9 = arith.constant dense<0.000000e+00> : vector<8x2xf32>
    %17 = vector.multi_reduction <add>, %16, %cst_9 [2] : vector<8x2x32xf32> to vector<8x2xf32>
    %18 = tpu.transpose %17, [1, 0] : vector<8x2xf32> -> vector<2x8xf32>
    %19 = arith.index_cast %arg1 : i32 to index
    %c0_10 = arith.constant 0 : index
    %c0_11 = arith.constant 0 : index
    %20 = vector.load %arg14[%19, %c0_10, %c0_11] : memref<1x2x8xf32, #tpu.memory_space<vmem>>, vector<1x2x8xf32>
    %21 = vector.shape_cast %20 : vector<1x2x8xf32> to vector<2x8xf32>
    %22 = vector.shape_cast %18 : vector<2x8xf32> to vector<1x2x8xf32>
    tpu.vector_store %arg14[%19, %c0_10, %c0_11], %22 {strides = array<i32>} : memref<1x2x8xf32, #tpu.memory_space<vmem>>, vector<1x2x8xf32>,
    %c0_12 = arith.constant 0 : index
    %c0_13 = arith.constant 0 : index
    %23 = vector.load %arg11[%c0_12, %c0_13] : memref<2x1xf32, #tpu.memory_space<vmem>>, vector<2x1xf32>
    %cst_14 = arith.constant dense<0xFF800000> : vector<2xf32>
    %24 = vector.multi_reduction <maximumf>, %18, %cst_14 [1] : vector<2x8xf32> to vector<2xf32>
    %25 = vector.shape_cast %24 : vector<2xf32> to vector<2x1xf32>
    %26 = arith.maximumf %23, %25 : vector<2x1xf32>
    %27 = arith.subf %23, %26 : vector<2x1xf32>
    %28 = math.exp %27 : vector<2x1xf32>
    %29 = vector.broadcast %26 : vector<2x1xf32> to vector<2x8xf32>
    %30 = arith.subf %18, %29 : vector<2x8xf32>
    %31 = math.exp %30 : vector<2x8xf32>
    %c0_15 = arith.constant 0 : index
    %c0_16 = arith.constant 0 : index
    %32 = vector.load %arg12[%c0_15, %c0_16] : memref<2x1xf32, #tpu.memory_space<vmem>>, vector<2x1xf32>
    %33 = arith.mulf %28, %32 : vector<2x1xf32>
    %cst_17 = arith.constant dense<0.000000e+00> : vector<2xf32>
    %34 = vector.multi_reduction <add>, %31, %cst_17 [1] : vector<2x8xf32> to vector<2xf32>
    %35 = vector.shape_cast %34 : vector<2xf32> to vector<2x1xf32>
    %36 = arith.addf %33, %35 : vector<2x1xf32>
    %c0_18 = arith.constant 0 : index
    %c0_19 = arith.constant 0 : index
    %37 = vector.load %arg12[%c0_18, %c0_19] : memref<2x1xf32, #tpu.memory_space<vmem>>, vector<2x1xf32>
    tpu.vector_store %arg12[%c0_18, %c0_19], %36 {strides = array<i32>} : memref<2x1xf32, #tpu.memory_space<vmem>>, vector<2x1xf32>,
    %38 = tpu.transpose %31, [1, 0] : vector<2x8xf32> -> vector<8x2xf32>
    %c0_20 = arith.constant 0 : index
    %c0_21 = arith.constant 0 : index
    %39 = vector.load %arg13[%c0_20, %c0_21] : memref<2x32xf32, #tpu.memory_space<vmem>>, vector<2x32xf32>
    %40 = vector.broadcast %28 : vector<2x1xf32> to vector<2x32xf32>
    %41 = arith.mulf %40, %39 : vector<2x32xf32>
    %42 = vector.shape_cast %38 : vector<8x2xf32> to vector<8x2x1xf32>
    %43 = vector.broadcast %42 : vector<8x2x1xf32> to vector<8x2x32xf32>
    %44 = arith.mulf %43, %3 : vector<8x2x32xf32>
    %cst_22 = arith.constant dense<0.000000e+00> : vector<2x32xf32>
    %45 = vector.multi_reduction <add>, %44, %cst_22 [0] : vector<8x2x32xf32> to vector<2x32xf32>
    %46 = arith.addf %41, %45 : vector<2x32xf32>
    %c0_23 = arith.constant 0 : index
    %c0_24 = arith.constant 0 : index
    %47 = vector.load %arg13[%c0_23, %c0_24] : memref<2x32xf32, #tpu.memory_space<vmem>>, vector<2x32xf32>
    tpu.vector_store %arg13[%c0_23, %c0_24], %46 {strides = array<i32>} : memref<2x32xf32, #tpu.memory_space<vmem>>, vector<2x32xf32>,
    %c0_25 = arith.constant 0 : index
    %c0_26 = arith.constant 0 : index
    %48 = vector.load %arg11[%c0_25, %c0_26] : memref<2x1xf32, #tpu.memory_space<vmem>>, vector<2x1xf32>
    tpu.vector_store %arg11[%c0_25, %c0_26], %26 {strides = array<i32>} : memref<2x1xf32, #tpu.memory_space<vmem>>, vector<2x1xf32>,
    %c0_i32_27 = arith.constant 0 : i32
    %49 = arith.cmpi eq, %arg1, %c0_i32_27 : i32
    %50 = arith.extui %49 : i1 to i32
    %c0_i32_28 = arith.constant 0 : i32
    %51 = arith.cmpi ne, %50, %c0_i32_28 : i32
    scf.if %51 {
      %c0_29 = arith.constant 0 : index
      %c0_30 = arith.constant 0 : index
      %52 = vector.load %arg12[%c0_29, %c0_30] : memref<2x1xf32, #tpu.memory_space<vmem>>, vector<2x1xf32>
      %53 = tpu.reciprocal %52 : vector<2x1xf32> -> vector<2x1xf32>
      %c0_31 = arith.constant 0 : index
      %c0_32 = arith.constant 0 : index
      %54 = vector.load %arg13[%c0_31, %c0_32] : memref<2x32xf32, #tpu.memory_space<vmem>>, vector<2x32xf32>
      %55 = vector.broadcast %53 : vector<2x1xf32> to vector<2x32xf32>
      %56 = arith.mulf %54, %55 : vector<2x32xf32>
      %c0_33 = arith.constant 0 : index
      %c0_34 = arith.constant 0 : index
      %c0_35 = arith.constant 0 : index
      %57 = vector.load %arg8[%c0_33, %c0_34, %c0_35] : memref<1x2x32xf32, #tpu.memory_space<vmem>>, vector<1x2x32xf32>
      %58 = vector.shape_cast %57 : vector<1x2x32xf32> to vector<2x32xf32>
      %59 = vector.shape_cast %56 : vector<2x32xf32> to vector<1x2x32xf32>
      tpu.vector_store %arg8[%c0_33, %c0_34, %c0_35], %59 {strides = array<i32>} : memref<1x2x32xf32, #tpu.memory_space<vmem>>, vector<1x2x32xf32>,
      %c0_36 = arith.constant 0 : index
      %c0_37 = arith.constant 0 : index
      %60 = vector.load %arg11[%c0_36, %c0_37] : memref<2x1xf32, #tpu.memory_space<vmem>>, vector<2x1xf32>
      %c0_38 = arith.constant 0 : index
      %c0_39 = arith.constant 0 : index
      %c0_40 = arith.constant 0 : index
      %61 = vector.load %arg14[%c0_38, %c0_39, %c0_40] : memref<1x2x8xf32, #tpu.memory_space<vmem>>, vector<1x2x8xf32>
      %62 = vector.shape_cast %61 : vector<1x2x8xf32> to vector<2x8xf32>
      %63 = vector.broadcast %60 : vector<2x1xf32> to vector<2x8xf32>
      %64 = arith.subf %62, %63 : vector<2x8xf32>
      %65 = math.exp %64 : vector<2x8xf32>
      %66 = vector.broadcast %53 : vector<2x1xf32> to vector<2x8xf32>
      %67 = arith.mulf %65, %66 : vector<2x8xf32>
      %c0_41 = arith.constant 0 : index
      %c0_42 = arith.constant 0 : index
      %68 = vector.load %arg9[%c0_41, %c0_42] : memref<2x8xf32, #tpu.memory_space<vmem>>, vector<2x8xf32>
      tpu.vector_store %arg9[%c0_41, %c0_42], %67 {strides = array<i32>} : memref<2x8xf32, #tpu.memory_space<vmem>>, vector<2x8xf32>,
    } else {
    }
    return
  }
  func.func @transform_0(%arg0: i32, %arg1: i32) -> (i32, i32, i32) {
    %c0_i32 = arith.constant 0 : i32
    %c0_i32_0 = arith.constant 0 : i32
    %c0_i32_1 = arith.constant 0 : i32
    return %c0_i32, %arg0, %c0_i32_0 : i32, i32, i32
  }
  func.func @transform_1(%arg0: i32, %arg1: i32) -> (i32, i32, i32) {
    %c0_i32 = arith.constant 0 : i32
    %c0_i32_0 = arith.constant 0 : i32
    return %arg1, %arg0, %c0_i32 : i32, i32, i32
  }
  func.func @transform_2(%arg0: i32, %arg1: i32) -> (i32, i32) {
    %c0_i32 = arith.constant 0 : i32
    %c0_i32_0 = arith.constant 0 : i32
    %c0_i32_1 = arith.constant 0 : i32
    return %c0_i32, %c0_i32_0 : i32, i32
  }
  func.func @transform_3(%arg0: i32, %arg1: i32) -> (i32, i32) {
    %c0_i32 = arith.constant 0 : i32
    %c0_i32_0 = arith.constant 0 : i32
    %c0_i32_1 = arith.constant 0 : i32
    return %c0_i32, %c0_i32_0 : i32, i32
  }
  func.func @transform_4(%arg0: i32, %arg1: i32) -> (i32, i32) {
    %c0_i32 = arith.constant 0 : i32
    %c0_i32_0 = arith.constant 0 : i32
    %c0_i32_1 = arith.constant 0 : i32
    return %c0_i32, %c0_i32_0 : i32, i32
  }
  func.func @transform_5(%arg0: i32, %arg1: i32) -> (i32, i32) {
    %c0_i32 = arith.constant 0 : i32
    %c0_i32_0 = arith.constant 0 : i32
    %c0_i32_1 = arith.constant 0 : i32
    return %c0_i32, %c0_i32_0 : i32, i32
  }
  func.func @transform_6(%arg0: i32, %arg1: i32) -> (i32, i32, i32) {
    %c0_i32 = arith.constant 0 : i32
    %c0_i32_0 = arith.constant 0 : i32
    %c0_i32_1 = arith.constant 0 : i32
    return %c0_i32, %arg0, %c0_i32_0 : i32, i32, i32
  }
  func.func @transform_7(%arg0: i32, %arg1: i32) -> (i32, i32) {
    %c0_i32 = arith.constant 0 : i32
    %c0_i32_0 = arith.constant 0 : i32
    return %arg0, %c0_i32 : i32, i32
  }
}

</mosaic_0001>

<llo_original>
// kernel: tpu_custom_call.1
$region0: #{tpu_custom_call.1}
  #allocation0 [shape = 'u32[]', space=smem, size = 0x4, offset = 0x4, fixed_abs, tag = 'smem constant byte address 0x4 - core index']
  #allocation1 [shape = 'u32[72,128]{1,0:T(1,128)}', space=vmem, size = 0x9000, scoped, tag = 'internal scratch']
  #allocation2 [shape = 'f32[2,32]{1,0:T(2,128)}', space=vmem, size = 0x400, scoped, tag = 'scratch operand']
  #allocation3 [shape = 'f32[2,1]{1,0:T(2,128)}', space=vmem, size = 0x400, scoped, tag = 'scratch operand']
  #allocation4 [shape = 'f32[2,1]{1,0:T(2,128)}', space=vmem, size = 0x400, scoped, tag = 'scratch operand']
  #allocation5 [shape = 'f32[2,32]{1,0:T(2,128)}', space=vmem, size = 0x400, scoped, tag = 'scratch operand']
  #allocation6 [shape = 'f32[1,2,8]{2,1,0:T(2,128)}', space=vmem, size = 0x400, scoped, tag = 'scratch operand']
  %s0 = inlined_call_operand.hbm [shape: f32[1,2,32], index: 0, kind: input, shape index: {}]
  %s1 = inlined_call_operand.hbm [shape: f32[8,2,32], index: 1, kind: input, shape index: {}]
  %s2 = inlined_call_operand.hbm [shape: f32[32,32], index: 2, kind: input, shape index: {}]
  %s3 = inlined_call_operand.hbm [shape: f32[32,32], index: 3, kind: input, shape index: {}]
  %s4 = inlined_call_operand.vmem [shape: f32[1,32], index: 4, kind: input, shape index: {}]
  %s5 = inlined_call_operand.vmem [shape: f32[1,32], index: 5, kind: input, shape index: {}]
  %s6 = inlined_call_operand.hbm [shape: f32[1,2,32], index: 6, kind: output, shape index: {0}]
  %s7 = inlined_call_operand.hbm [shape: f32[2,8], index: 7, kind: output, shape index: {1}]
  %8 = xla_tuple %s6, %s7
  %s9 = sld [smem:[#allocation0]]
  $region66: #{tpu_custom_call.1} parent=0
    _
  %s11 = ssub.s32 1, %s9
  %s12 = scalar_select 0, %s11, %s9
  $region1: #{tpu_custom_call.1} parent=0
    #allocation7 [shape = 'u8[1024]{0}', space=vmem, size = 0x400, scoped, tag = 'input window, operand 0, single buffered']
    #allocation8 [shape = 's32[1]{0}', space=sflag, size = 0x4, scoped, tag = 'scoped memory for tpu_custom_call.1']
    #allocation9 [shape = 's32[1]{0}', space=sflag, size = 0x4, scoped, tag = 'scoped memory for tpu_custom_call.1']
    #allocation10 [shape = 'u8[8192]{0}', space=vmem, size = 0x2000, scoped, tag = 'input window, operand 1, single buffered']
    #allocation11 [shape = 's32[1]{0}', space=sflag, size = 0x4, scoped, tag = 'scoped memory for tpu_custom_call.1']
    #allocation12 [shape = 'u8[16384]{0}', space=vmem, size = 0x4000, scoped, tag = 'input window, operand 2, single buffered']
    #allocation13 [shape = 'u8[16384]{0}', space=vmem, size = 0x4000, scoped, tag = 'input window, operand 3, single buffered']
    #allocation14 [shape = 's32[1]{0}', space=sflag, size = 0x4, scoped, tag = 'scoped memory for tpu_custom_call.1']
    #allocation15 [shape = 'u8[1024]{0}', space=vmem, size = 0x400, scoped, tag = 'output window, operand 0, single buffered']
    #allocation16 [shape = 'u8[1024]{0}', space=vmem, size = 0x400, scoped, tag = 'output window, operand 1, single buffered']
    #allocation17 [shape = 's32[1]{0}', space=sflag, size = 0x4, scoped, tag = 'scoped memory for tpu_custom_call.1']
    %13 = vsyncpa [#allocation8], 0
    %14 = vsyncpa [#allocation11], 0
    %15 = vsyncpa [#allocation14], 0
    %16 = vsyncpa [#allocation9], 0
    %17 = vsyncpa [#allocation17], 0
    // Predicated region
    $region2: #{tpu_custom_call.1} parent=1 // pred_check
      _
    $region3: #{tpu_custom_call.1} parent=1 // pred_check_branch
      %19 = sbr.rel (0) target = $region5
    $region4: #{tpu_custom_call.1} parent=1 // pred_region
      %21 = vsyncadd [#allocation8], 0
      %s23 = sshll.u32 %s0, 4
      %s24 = int_to_ptr.hbm [resolvable:$true] %s23
      %s25 = sshll.u32 [#allocation7], 4
      %s26 = int_to_ptr.vmem [resolvable:$true] %s25
      %28 = dma.hbm_to_vmem [thread:$0]  %s24, 32, %s26, [#allocation8]
    $region5: #{tpu_custom_call.1} parent=1 // pred_fallthru
      _
    // Predicated region
    $region6: #{tpu_custom_call.1} parent=1 // pred_check
      _
    $region7: #{tpu_custom_call.1} parent=1 // pred_check_branch
      %30 = sbr.rel (0) target = $region9
    $region8: #{tpu_custom_call.1} parent=1 // pred_region
      %32 = vsyncadd [#allocation11], 0
      %s33 = sshll.u32 %s1, 4
      %s34 = int_to_ptr.hbm [resolvable:$true] %s33
      %s35 = sshll.u32 [#allocation10], 4
      %s36 = int_to_ptr.vmem [resolvable:$true] %s35
      %41 = dma.hbm_to_vmem [thread:$0]  %s34, 256, %s36, [#allocation11], 32, 32, 2
    $region9: #{tpu_custom_call.1} parent=1 // pred_fallthru
      _
    // Predicated region
    $region10: #{tpu_custom_call.1} parent=1 // pred_check
      _
    $region11: #{tpu_custom_call.1} parent=1 // pred_check_branch
      %43 = sbr.rel (0) target = $region13
    $region12: #{tpu_custom_call.1} parent=1 // pred_region
      %45 = vsyncadd [#allocation11], 0
      %s46 = sshll.u32 %s2, 4
      %s47 = int_to_ptr.hbm [resolvable:$true] %s46
      %s48 = sshll.u32 [#allocation12], 4
      %s49 = int_to_ptr.vmem [resolvable:$true] %s48
      %54 = dma.hbm_to_vmem [thread:$0]  %s47, 512, %s49, [#allocation11], 128, 128, 8
    $region13: #{tpu_custom_call.1} parent=1 // pred_fallthru
      _
    // Predicated region
    $region14: #{tpu_custom_call.1} parent=1 // pred_check
      _
    $region15: #{tpu_custom_call.1} parent=1 // pred_check_branch
      %56 = sbr.rel (0) target = $region17
    $region16: #{tpu_custom_call.1} parent=1 // pred_region
      %58 = vsyncadd [#allocation14], 0
      %s59 = sshll.u32 %s3, 4
      %s60 = int_to_ptr.hbm [resolvable:$true] %s59
      %s61 = sshll.u32 [#allocation13], 4
      %s62 = int_to_ptr.vmem [resolvable:$true] %s61
      %67 = dma.hbm_to_vmem [thread:$0]  %s60, 512, %s62, [#allocation14], 128, 128, 8
    $region17: #{tpu_custom_call.1} parent=1 // pred_fallthru
      _
    // Predicated region
    $region18: #{tpu_custom_call.1} parent=1 // pred_check
      _
    $region19: #{tpu_custom_call.1} parent=1 // pred_check_branch
      %69 = sbr.rel (0) target = $region21
    $region20: #{tpu_custom_call.1} parent=1 // pred_region
      _
    $region21: #{tpu_custom_call.1} parent=1 // pred_fallthru
      _
    // Predicated region
    $region22: #{tpu_custom_call.1} parent=1 // pred_check
      _
    $region23: #{tpu_custom_call.1} parent=1 // pred_check_branch
      %71 = sbr.rel (0) target = $region25
    $region24: #{tpu_custom_call.1} parent=1 // pred_region
      _
    $region25: #{tpu_custom_call.1} parent=1 // pred_fallthru
      _
    // Predicated region
    $region26: #{tpu_custom_call.1} parent=1 // pred_check
      _
    $region27: #{tpu_custom_call.1} parent=1 // pred_check_branch
      %73 = sbr.rel (0) target = $region29
    $region28: #{tpu_custom_call.1} parent=1 // pred_region
      %75 = dma.done [#allocation8], 32
    $region29: #{tpu_custom_call.1} parent=1 // pred_fallthru
      _
    // Predicated region
    $region30: #{tpu_custom_call.1} parent=1 // pred_check
      _
    $region31: #{tpu_custom_call.1} parent=1 // pred_check_branch
      %77 = sbr.rel (0) target = $region33
    $region32: #{tpu_custom_call.1} parent=1 // pred_region
      %79 = dma.done [#allocation11], 256
    $region33: #{tpu_custom_call.1} parent=1 // pred_fallthru
      _
    // Predicated region
    $region34: #{tpu_custom_call.1} parent=1 // pred_check
      _
    $region35: #{tpu_custom_call.1} parent=1 // pred_check_branch
      %81 = sbr.rel (0) target = $region37
    $region36: #{tpu_custom_call.1} parent=1 // pred_region
      %83 = dma.done [#allocation11], 512
    $region37: #{tpu_custom_call.1} parent=1 // pred_fallthru
      _
    // Predicated region
    $region38: #{tpu_custom_call.1} parent=1 // pred_check
      _
    $region39: #{tpu_custom_call.1} parent=1 // pred_check_branch
      %85 = sbr.rel (0) target = $region41
    $region40: #{tpu_custom_call.1} parent=1 // pred_region
      %87 = dma.done [#allocation14], 512
    $region41: #{tpu_custom_call.1} parent=1 // pred_fallthru
      _
    %p88 = scmp.eq.s32.totalorder 0, 0
    // Predicated region
    $region42: #{tpu_custom_call.1} parent=1 // pred_check
      %p89 = pneg %p88
    $region43: #{tpu_custom_call.1} parent=1 // pred_check_branch
      %91 = sbr.rel (%p89) target = $region45
    $region44: #{tpu_custom_call.1} parent=1 // pred_region
      %v92 = vld [vmem:[#allocation7] sm:$0x3]
      %v93 = vld [vmem:[#allocation12] sm:$0xff]
      %v94 = vld [vmem:[#allocation12 + $0x8] sm:$0xff]
      %v95 = vld [vmem:[#allocation12 + $0x10] sm:$0xff]
      %v96 = vld [vmem:[#allocation12 + $0x18] sm:$0xff]
      %v97 = vld [vmem:[%s4] sm:$0x1]
      %v99 = vperm.slane %v97, 0
      %vm101 = vcmask 261120
      %v103 = vsel %vm101, %v92, 0
      %105 = vmatpush.msra.mxu0 0.0
      %106 = vmatpush.msra.mxu0 0.0
      %107 = vmatpush.msra.mxu0 0.0
      %108 = vmatpush.msra.mxu0 0.0
      %109 = vmatpush.msra.mxu0 0.0
      %110 = vmatpush.msra.mxu0 0.0
      %111 = vmatpush.msra.mxu0 0.0
      %112 = vmatpush.msra.mxu0 0.0
      %113 = vmatpush.msra.mxu0 0.0
      %114 = vmatpush.msra.mxu0 0.0
      %115 = vmatpush.msra.mxu0 0.0
      %116 = vmatpush.msra.mxu0 0.0
      %117 = vmatpush.msra.mxu0 %v96
      %118 = vmatpush.msra.mxu0 %v95
      %119 = vmatpush.msra.mxu0 %v94
      %120 = vmatpush.msra.mxu0 %v93
      %121 = vmatmul.f32.gmra.mxu0 %v103
      %v122 = vpop.f32.mrf.mxu0
      %v123 = vadd.f32 %v99, %v122
      %124 = vdwg.mxu0
      %vm125 = vcmask 254976
      %126 = vst.msk [vmem:[#allocation2] sm:$0x3] %vm125, %v123
      %vm127 = vcmask 1024
      %128 = vst.msk [vmem:[#allocation3] sm:$0x3] %vm127, -inf
      %129 = vst.msk [vmem:[#allocation4] sm:$0x3] %vm127, 0.0
      %130 = vst.msk [vmem:[#allocation5] sm:$0x3] %vm125, 0.0
    $region45: #{tpu_custom_call.1} parent=1 // pred_fallthru
      _
    %v131 = vld [vmem:[#allocation10] sm:$0x3]
    %v132 = vld [vmem:[#allocation10 + $0x2] sm:$0x3]
    %v133 = vld [vmem:[#allocation10 + $0x4] sm:$0x3]
    %v134 = vld [vmem:[#allocation10 + $0x6] sm:$0x3]
    %v135 = vld [vmem:[#allocation10 + $0x8] sm:$0x3]
    %v136 = vld [vmem:[#allocation10 + $0xa] sm:$0x3]
    %v137 = vld [vmem:[#allocation10 + $0xc] sm:$0x3]
    %v138 = vld [vmem:[#allocation10 + $0xe] sm:$0x3]
    %v139 = vld [vmem:[#allocation13] sm:$0xff]
    %v140 = vld [vmem:[#allocation13 + $0x8] sm:$0xff]
    %v141 = vld [vmem:[#allocation13 + $0x10] sm:$0xff]
    %v142 = vld [vmem:[#allocation13 + $0x18] sm:$0xff]
    %151 = vst [vmem:[#allocation1] ss:$4 sm:$0xff] %v131
    %s152 = scalar_lea.vmem [#allocation1], 1
    %153 = vst [vmem:[%s152] ss:$4 sm:$0xff] %v132
    %s154 = scalar_lea.vmem [#allocation1], 2
    %155 = vst [vmem:[%s154] ss:$4 sm:$0xff] %v133
    %s156 = scalar_lea.vmem [#allocation1], 3
    %157 = vst [vmem:[%s156] ss:$4 sm:$0xff] %v134
    %s158 = scalar_lea.vmem [#allocation1], 32
    %159 = vst [vmem:[%s158] ss:$4 sm:$0xff] %v135
    %s160 = scalar_lea.vmem [#allocation1], 33
    %161 = vst [vmem:[%s160] ss:$4 sm:$0xff] %v136
    %s162 = scalar_lea.vmem [#allocation1], 34
    %163 = vst [vmem:[%s162] ss:$4 sm:$0xff] %v137
    %s164 = scalar_lea.vmem [#allocation1], 35
    %165 = vst [vmem:[%s164] ss:$4 sm:$0xff] %v138
    %v166 = vld.sshfl [vmem:[#allocation1] sm:$0xff pattern:$0x73625140]
    %v167 = vld.sshfl [vmem:[#allocation1 + $0x20] sm:$0xff pattern:$0x73625140]
    %vm168 = vcmask 261120
    %v169 = vsel %vm168, %v166, 0
    %v171 = vsel %vm168, %v167, 0
    %173 = vmatpush.msra.mxu0 0.0
    %174 = vmatpush.msra.mxu0 0.0
    %175 = vmatpush.msra.mxu0 0.0
    %176 = vmatpush.msra.mxu0 0.0
    %177 = vmatpush.msra.mxu0 0.0
    %178 = vmatpush.msra.mxu0 0.0
    %179 = vmatpush.msra.mxu0 0.0
    %180 = vmatpush.msra.mxu0 0.0
    %181 = vmatpush.msra.mxu0 0.0
    %182 = vmatpush.msra.mxu0 0.0
    %183 = vmatpush.msra.mxu0 0.0
    %184 = vmatpush.msra.mxu0 0.0
    %185 = vmatpush.msra.mxu0 %v142
    %186 = vmatpush.msra.mxu0 %v141
    %187 = vmatpush.msra.mxu0 %v140
    %188 = vmatpush.msra.mxu0 %v139
    %189 = vmatmul.f32.gmra.mxu0 %v169
    %v190 = vpop.f32.mrf.mxu0
    %v191 = vadd.f32 0.0, %v190
    %192 = vmatmul.f32.gmra.mxu0 %v171
    %v193 = vpop.f32.mrf.mxu0
    %v194 = vadd.f32 0.0, %v193
    %195 = vdwg.mxu0
    %v198 = vrot.slane %v191, 2
    %v199 = vrot.slane %v191, 4
    %v200 = vrot.slane %v191, 6
    %v201 = vrot.slane %v194, 2
    %v202 = vrot.slane %v194, 4
    %v203 = vrot.slane %v194, 6
    %v210 = vld [vmem:[#allocation2] sm:$0x3]
    %v211 = vadd.f32 %v191, %v210
    %v212 = vadd.f32 %v198, %v210
    %v213 = vadd.f32 %v199, %v210
    %v214 = vadd.f32 %v200, %v210
    %v215 = vadd.f32 %v194, %v210
    %v216 = vadd.f32 %v201, %v210
    %v217 = vadd.f32 %v202, %v210
    %v218 = vadd.f32 %v203, %v210
    %v219 = vtanh.pop %v211
    %v220 = vtanh.pop %v212
    %v221 = vtanh.pop %v213
    %v222 = vtanh.pop %v214
    %v223 = vtanh.pop %v215
    %v224 = vtanh.pop %v216
    %v225 = vtanh.pop %v217
    %v226 = vtanh.pop %v218
    %v227 = vld [vmem:[%s5] sm:$0x1]
    %v229 = vperm.slane %v227, 0
    %v231 = vmul.f32 %v219, %v229
    %v232 = vmul.f32 %v220, %v229
    %v233 = vmul.f32 %v221, %v229
    %v234 = vmul.f32 %v222, %v229
    %v235 = vmul.f32 %v223, %v229
    %v236 = vmul.f32 %v224, %v229
    %v237 = vmul.f32 %v225, %v229
    %v238 = vmul.f32 %v226, %v229
    %vm239 = vcmask 254976
    %v240 = vsel %vm239, %v231, 0.0
    %241 = vadd.xlane.f32.xlu0 %v240
    %v242 = vpop.xlane.xlu0 %241
    %v243 = vsel %vm239, %v232, 0.0
    %244 = vadd.xlane.f32.xlu0 %v243
    %v245 = vpop.xlane.xlu0 %244
    %v246 = vsel %vm239, %v233, 0.0
    %247 = vadd.xlane.f32.xlu0 %v246
    %v248 = vpop.xlane.xlu0 %247
    %v249 = vsel %vm239, %v234, 0.0
    %250 = vadd.xlane.f32.xlu0 %v249
    %v251 = vpop.xlane.xlu0 %250
    %v252 = vsel %vm239, %v235, 0.0
    %253 = vadd.xlane.f32.xlu0 %v252
    %v254 = vpop.xlane.xlu0 %253
    %v255 = vsel %vm239, %v236, 0.0
    %256 = vadd.xlane.f32.xlu0 %v255
    %v257 = vpop.xlane.xlu0 %256
    %v258 = vsel %vm239, %v237, 0.0
    %259 = vadd.xlane.f32.xlu0 %v258
    %v260 = vpop.xlane.xlu0 %259
    %v261 = vsel %vm239, %v238, 0.0
    %262 = vadd.xlane.f32.xlu0 %v261
    %v263 = vpop.xlane.xlu0 %262
    %v272 = vlaneseq
    %v273 = vand.u32 %v272, 127
    %v274 = vperm.slane %v242, %v273
    %v275 = vperm.slane %v245, %v273
    %v276 = vperm.slane %v248, %v273
    %v277 = vperm.slane %v251, %v273
    %v278 = vperm.slane %v254, %v273
    %v279 = vperm.slane %v257, %v273
    %v280 = vperm.slane %v260, %v273
    %v281 = vperm.slane %v263, %v273
    %vm282 = vcmask 1041409
    %v283 = vsel %vm282, %v275, %v274
    %vm284 = vcmask 1042434
    %v285 = vsel %vm284, %v276, %v283
    %vm286 = vcmask 1043459
    %v287 = vsel %vm286, %v277, %v285
    %vm288 = vcmask 1044484
    %v289 = vsel %vm288, %v278, %v287
    %vm290 = vcmask 1045509
    %v291 = vsel %vm290, %v279, %v289
    %vm292 = vcmask 1046534
    %v293 = vsel %vm292, %v280, %v291
    %vm294 = vcmask 1047559
    %v295 = vsel %vm294, %v281, %v293
    %297 = vxpose.xlu0.b32.start [1/16] %v295, 128
    %298 = vxpose.xlu0.b32.cont [2/16] 0.0, 128
    %299 = vxpose.xlu0.b32.cont [3/16] 0.0, 128
    %300 = vxpose.xlu0.b32.cont [4/16] 0.0, 128
    %301 = vxpose.xlu0.b32.cont [5/16] 0.0, 128
    %302 = vxpose.xlu0.b32.cont [6/16] 0.0, 128
    %303 = vxpose.xlu0.b32.cont [7/16] 0.0, 128
    %304 = vxpose.xlu0.b32.cont [8/16] 0.0, 128
    %305 = vxpose.xlu0.b32.cont [9/16] 0.0, 128
    %306 = vxpose.xlu0.b32.cont [10/16] 0.0, 128
    %307 = vxpose.xlu0.b32.cont [11/16] 0.0, 128
    %308 = vxpose.xlu0.b32.cont [12/16] 0.0, 128
    %309 = vxpose.xlu0.b32.cont [13/16] 0.0, 128
    %310 = vxpose.xlu0.b32.cont [14/16] 0.0, 128
    %311 = vxpose.xlu0.b32.cont [15/16] 0.0, 128
    %312 = vxpose.xlu0.b32.end [16/16] 0.0, 128
    %v313 = vpop.trf.xlu0
    %v314 = vpop.trf.xlu0
    %v315 = vpop.trf.xlu0
    %v316 = vpop.trf.xlu0
    %v317 = vpop.trf.xlu0
    %v318 = vpop.trf.xlu0
    %v319 = vpop.trf.xlu0
    %v320 = vpop.trf.xlu0
    %v321 = vpop.trf.xlu0
    %v322 = vpop.trf.xlu0
    %v323 = vpop.trf.xlu0
    %v324 = vpop.trf.xlu0
    %v325 = vpop.trf.xlu0
    %v326 = vpop.trf.xlu0
    %v327 = vpop.trf.xlu0
    %v328 = vpop.trf.xlu0
    %s329 = smul.u32 0, 2
    %s330 = scalar_lea.vmem [#allocation6], %s329
    %vm331 = vcmask 58368
    %332 = vst.msk [vmem:[%s330] sm:$0x3] %vm331, %v313
    %v333 = vld [vmem:[#allocation3] sm:$0x3]
    %v334 = vsel %vm331, %v313, -inf
    %335 = vmax.xlane.f32.xlu0 %v334
    %v336 = vpop.xlane.xlu0 %335
    %v337 = vmax.f32 %v333, %v336
    %v338 = vsub.f32 %v333, %v337
    %v339 = vmul.f32 %v338, 1.442695
    %v340 = vpow.pop %v339
    %342 = vset.pattern.permute.xlu0 0
    %343 = vperm.xlu0 %342, %v337
    %v344 = vpop.permute.xlu0 %343
    %v346 = vsub.f32 %v313, %v344
    %v347 = vmul.f32 %v346, 1.442695
    %v348 = vpow.pop %v347
    %v349 = vld [vmem:[#allocation4] sm:$0x3]
    %v350 = vmul.f32 %v340, %v349
    %v351 = vsel %vm331, %v348, 0.0
    %352 = vadd.xlane.f32.xlu0 %v351
    %v353 = vpop.xlane.xlu0 %352
    %v354 = vadd.f32 %v350, %v353
    %vm355 = vcmask 1024
    %356 = vst.msk [vmem:[#allocation4] sm:$0x3] %vm355, %v354
    %357 = vxpose.xlu0.b32.start [1/16] %v348, 128
    %358 = vxpose.xlu0.b32.cont [2/16] 0.0, 128
    %359 = vxpose.xlu0.b32.cont [3/16] 0.0, 128
    %360 = vxpose.xlu0.b32.cont [4/16] 0.0, 128
    %361 = vxpose.xlu0.b32.cont [5/16] 0.0, 128
    %362 = vxpose.xlu0.b32.cont [6/16] 0.0, 128
    %363 = vxpose.xlu0.b32.cont [7/16] 0.0, 128
    %364 = vxpose.xlu0.b32.cont [8/16] 0.0, 128
    %365 = vxpose.xlu0.b32.cont [9/16] 0.0, 128
    %366 = vxpose.xlu0.b32.cont [10/16] 0.0, 128
    %367 = vxpose.xlu0.b32.cont [11/16] 0.0, 128
    %368 = vxpose.xlu0.b32.cont [12/16] 0.0, 128
    %369 = vxpose.xlu0.b32.cont [13/16] 0.0, 128
    %370 = vxpose.xlu0.b32.cont [14/16] 0.0, 128
    %371 = vxpose.xlu0.b32.cont [15/16] 0.0, 128
    %372 = vxpose.xlu0.b32.end [16/16] 0.0, 128
    %v373 = vpop.trf.xlu0
    %v374 = vpop.trf.xlu0
    %v375 = vpop.trf.xlu0
    %v376 = vpop.trf.xlu0
    %v377 = vpop.trf.xlu0
    %v378 = vpop.trf.xlu0
    %v379 = vpop.trf.xlu0
    %v380 = vpop.trf.xlu0
    %v381 = vpop.trf.xlu0
    %v382 = vpop.trf.xlu0
    %v383 = vpop.trf.xlu0
    %v384 = vpop.trf.xlu0
    %v385 = vpop.trf.xlu0
    %v386 = vpop.trf.xlu0
    %v387 = vpop.trf.xlu0
    %v388 = vpop.trf.xlu0
    %v389 = vld [vmem:[#allocation5] sm:$0x3]
    %391 = vset.pattern.permute.xlu0 0
    %392 = vperm.xlu0 %391, %v340
    %v393 = vpop.permute.xlu0 %392
    %v395 = vmul.f32 %v393, %v389
    %v396 = vperm.slane %v373, 0
    %v397 = vlaneseq
    %v398 = vshrl.u32 %v397, 7
    %400 = vset.pattern.permute.xlu0 %v398
    %401 = vperm.xlu0 %400, %v396
    %v402 = vpop.permute.xlu0 %401
    %v403 = vperm.slane %v373, 1
    %v404 = vlaneseq
    %v405 = vshrl.u32 %v404, 7
    %407 = vset.pattern.permute.xlu0 %v405
    %408 = vperm.xlu0 %407, %v403
    %v409 = vpop.permute.xlu0 %408
    %v410 = vperm.slane %v373, 2
    %v411 = vlaneseq
    %v412 = vshrl.u32 %v411, 7
    %414 = vset.pattern.permute.xlu0 %v412
    %415 = vperm.xlu0 %414, %v410
    %v416 = vpop.permute.xlu0 %415
    %v417 = vperm.slane %v373, 3
    %v418 = vlaneseq
    %v419 = vshrl.u32 %v418, 7
    %421 = vset.pattern.permute.xlu0 %v419
    %422 = vperm.xlu0 %421, %v417
    %v423 = vpop.permute.xlu0 %422
    %v424 = vperm.slane %v373, 4
    %v425 = vlaneseq
    %v426 = vshrl.u32 %v425, 7
    %428 = vset.pattern.permute.xlu0 %v426
    %429 = vperm.xlu0 %428, %v424
    %v430 = vpop.permute.xlu0 %429
    %v431 = vperm.slane %v373, 5
    %v432 = vlaneseq
    %v433 = vshrl.u32 %v432, 7
    %435 = vset.pattern.permute.xlu0 %v433
    %436 = vperm.xlu0 %435, %v431
    %v437 = vpop.permute.xlu0 %436
    %v438 = vperm.slane %v373, 6
    %v439 = vlaneseq
    %v440 = vshrl.u32 %v439, 7
    %442 = vset.pattern.permute.xlu0 %v440
    %443 = vperm.xlu0 %442, %v438
    %v444 = vpop.permute.xlu0 %443
    %v445 = vperm.slane %v373, 7
    %v446 = vlaneseq
    %v447 = vshrl.u32 %v446, 7
    %449 = vset.pattern.permute.xlu0 %v447
    %450 = vperm.xlu0 %449, %v445
    %v451 = vpop.permute.xlu0 %450
    %v452 = vmul.f32 %v402, %v131
    %v453 = vmul.f32 %v409, %v132
    %v454 = vmul.f32 %v416, %v133
    %v455 = vmul.f32 %v423, %v134
    %v456 = vmul.f32 %v430, %v135
    %v457 = vmul.f32 %v437, %v136
    %v458 = vmul.f32 %v444, %v137
    %v459 = vmul.f32 %v451, %v138
    %v460 = vsel %vm239, %v452, 0.0
    %v461 = vsel %vm239, %v453, 0.0
    %v462 = vadd.f32 %v460, %v461
    %v463 = vsel %vm239, %v454, 0.0
    %v464 = vadd.f32 %v462, %v463
    %v465 = vsel %vm239, %v455, 0.0
    %v466 = vadd.f32 %v464, %v465
    %v467 = vsel %vm239, %v456, 0.0
    %v468 = vadd.f32 %v466, %v467
    %v469 = vsel %vm239, %v457, 0.0
    %v470 = vadd.f32 %v468, %v469
    %v471 = vsel %vm239, %v458, 0.0
    %v472 = vadd.f32 %v470, %v471
    %v473 = vsel %vm239, %v459, 0.0
    %v474 = vadd.f32 %v472, %v473
    %v475 = vadd.f32 %v395, %v474
    %476 = vst.msk [vmem:[#allocation5] sm:$0x3] %vm239, %v475
    %477 = vst.msk [vmem:[#allocation3] sm:$0x3] %vm355, %v337
    // Predicated region
    $region46: #{tpu_custom_call.1} parent=1 // pred_check
      %p478 = pneg %p88
    $region47: #{tpu_custom_call.1} parent=1 // pred_check_branch
      %480 = sbr.rel (%p478) target = $region49
    $region48: #{tpu_custom_call.1} parent=1 // pred_region
      %v481 = vld [vmem:[#allocation4] sm:$0x3]
      %v482 = vrcp.pop %v481
      %v483 = vmul.f32 %v481, %v482
      %v484 = vsub.f32 1.0, %v483
      %v485 = vmul.f32 %v482, %v484
      %v486 = vadd.f32 %v482, %v485
      %vm487 = vweird.f32 %v481
      %vm488 = vweird.f32 %v482
      %vm489 = vmor %vm487, %vm488
      %v490 = vsel %vm489, %v482, %v486
      %v491 = vand.u32 2147483647, %v481
      %vm492 = vcmp.eq.f32.partialorder %v491, 8.507059e+37
      %v493 = vand.u32 %v481, 2147483648
      %v494 = vor.u32 1.1754944e-38, %v493
      %v495 = vsel %vm492, %v494, %v490
      %v496 = vld [vmem:[#allocation5] sm:$0x3]
      %498 = vset.pattern.permute.xlu0 0
      %499 = vperm.xlu0 %498, %v495
      %v500 = vpop.permute.xlu0 %499
      %v502 = vmul.f32 %v496, %v500
      %503 = vst.msk [vmem:[#allocation15] sm:$0x3] %vm239, %v502
      %v504 = vld [vmem:[#allocation3] sm:$0x3]
      %v505 = vld [vmem:[#allocation6] sm:$0x3]
      %507 = vset.pattern.permute.xlu0 0
      %508 = vperm.xlu0 %507, %v504
      %v509 = vpop.permute.xlu0 %508
      %v511 = vsub.f32 %v505, %v509
      %v512 = vmul.f32 %v511, 1.442695
      %v513 = vpow.pop %v512
      %v514 = vmul.f32 %v513, %v500
      %515 = vst.msk [vmem:[#allocation16] sm:$0x3] %vm331, %v514
    $region49: #{tpu_custom_call.1} parent=1 // pred_fallthru
      _
    // Predicated region
    $region50: #{tpu_custom_call.1} parent=1 // pred_check
      _
    $region51: #{tpu_custom_call.1} parent=1 // pred_check_branch
      %517 = sbr.rel (0) target = $region53
    $region52: #{tpu_custom_call.1} parent=1 // pred_region
      %519 = vsyncadd [#allocation9], 0
      %s521 = sshll.u32 [#allocation15], 4
      %s522 = int_to_ptr.vmem [resolvable:$true] %s521
      %s523 = sshll.u32 %s6, 4
      %s524 = int_to_ptr.hbm [resolvable:$true] %s523
      %526 = dma.vmem_to_hbm [thread:$0]  %s522, 32, %s524, [#allocation9]
    $region53: #{tpu_custom_call.1} parent=1 // pred_fallthru
      _
    // Predicated region
    $region54: #{tpu_custom_call.1} parent=1 // pred_check
      _
    $region55: #{tpu_custom_call.1} parent=1 // pred_check_branch
      %528 = sbr.rel (0) target = $region57
    $region56: #{tpu_custom_call.1} parent=1 // pred_region
      %530 = vsyncadd [#allocation17], 0
      %s532 = sshll.u32 [#allocation16], 4
      %s533 = int_to_ptr.vmem [resolvable:$true] %s532
      %s534 = sshll.u32 %s7, 4
      %s535 = int_to_ptr.hbm [resolvable:$true] %s534
      %537 = dma.vmem_to_hbm [thread:$0]  %s533, 32, %s535, [#allocation17]
    $region57: #{tpu_custom_call.1} parent=1 // pred_fallthru
      _
    // Predicated region
    $region58: #{tpu_custom_call.1} parent=1 // pred_check
      _
    $region59: #{tpu_custom_call.1} parent=1 // pred_check_branch
      %539 = sbr.rel (0) target = $region61
    $region60: #{tpu_custom_call.1} parent=1 // pred_region
      %541 = dma.done [#allocation9], 32
    $region61: #{tpu_custom_call.1} parent=1 // pred_fallthru
      _
    // Predicated region
    $region62: #{tpu_custom_call.1} parent=1 // pred_check
      _
    $region63: #{tpu_custom_call.1} parent=1 // pred_check_branch
      %543 = sbr.rel (0) target = $region65
    $region64: #{tpu_custom_call.1} parent=1 // pred_region
      %545 = dma.done [#allocation17], 32
    $region65: #{tpu_custom_call.1} parent=1 // pred_fallthru
      _
    %546 = vsyncpa [#allocation8], 1
    %547 = vsyncpa [#allocation11], 1
    %548 = vsyncpa [#allocation14], 1
    %549 = vsyncpa [#allocation9], 1
    %550 = vsyncpa [#allocation17], 1

</llo_original>
